<compile_context>
chip_gen: v5e
topology: v5e:2x2
jax: 0.10.0
libtpu: 0.0.40
codegen_flags: <defaults>
</compile_context>

<pallas_src>
import functools

import jax
import jax.numpy as jnp
from jax.experimental import pallas as pl
from jax.experimental.pallas import tpu as pltpu


def _round_up(a, m):
    return (a + m - 1) // m * m


def gcn_kernel(x_ref, w1t_ref, b1_ref, w2_ref, o_ref, *, tb, sp):
    # x_ref  : (tb*sp, Np)  batch tile, batch folded into rows
    # w1t_ref: (Np, Np)     conv1 weight, already transposed (in_node, out_node)
    # b1_ref : (1, Np)      conv1 bias (zero in padded lanes)
    # w2_ref : (sp, sp)     conv2 weight (zero in padded rows/cols)
    # o_ref  : (tb*sp, Np)
    x = x_ref[...].astype(jnp.float32)
    w1t = w1t_ref[...]
    b1 = b1_ref[...]
    w2 = w2_ref[...]

    # conv1 over the node axis for the whole batch tile at once:
    # MXU M-dim = tb*sp instead of sp; lane dim Np is a 128-multiple.
    h = jnp.dot(x, w1t, preferred_element_type=jnp.float32) + b1
    h = h - x  # residual subtract

    # conv2 over the state axis, per batch element (static unroll; slices are
    # 8-sublane aligned so they stay tile-aligned). relu fused into each
    # unmasked lane-dense (sp, Np) store.
    for b in range(tb):
        hb = h[b * sp:(b + 1) * sp, :]
        ob = jnp.dot(w2, hb, preferred_element_type=jnp.float32)
        o_ref[pl.ds(b * sp, sp), :] = jnp.maximum(ob, 0.0).astype(o_ref.dtype)


def gcn_forward(x, w1, b1, w2, *, tb=None):
    """x: (B, S, N); w1: (N, N) = conv1.weight[:, :, 0]; b1: (N,); w2: (S, S) = conv2.weight[:, :, 0]."""
    B, S, N = x.shape
    if tb is None:
        # Fold the whole (small) batch into one grid step: per-step overhead
        # (~0.35 us) dominates at these sizes. For large B, pick tb so that
        # B // tb >= 2 (megacore shards) and the double-buffered (tb*Sp, Np)
        # tiles stay well under the VMEM budget.
        tb = B
    assert B % tb == 0, "batch must be divisible by the batch tile"

    Sp = _round_up(S, 8)     # sublane alignment
    Np = _round_up(N, 128)   # lane-dense last dim (unmasked stores)

    # Zero-pad: padded node lanes of w1t/b1 are zero and padded state rows/cols
    # of w2 are zero, so padded entries never contaminate the real outputs.
    xp = jnp.pad(x, ((0, 0), (0, Sp - S), (0, Np - N))).reshape(B * Sp, Np)
    w1t = jnp.pad(w1.T, ((0, Np - N), (0, Np - N))).astype(jnp.float32)   # pre-transposed once
    b1p = jnp.pad(b1, (0, Np - N)).reshape(1, Np).astype(jnp.float32)
    w2p = jnp.pad(w2, ((0, Sp - S), (0, Sp - S))).astype(jnp.float32)

    flops = 2 * B * Sp * Np * Np + 2 * B * Sp * Sp * Np
    bytes_accessed = 4 * (2 * B * Sp * Np + Np * Np + Np + Sp * Sp)
    cost = pl.CostEstimate(flops=flops, transcendentals=0,
                           bytes_accessed=bytes_accessed)

    kernel = functools.partial(gcn_kernel, tb=tb, sp=Sp)

    out = pl.pallas_call(
        kernel,
        out_shape=jax.ShapeDtypeStruct((B * Sp, Np), x.dtype),
        grid_spec=pltpu.PrefetchScalarGridSpec(
            num_scalar_prefetch=0,
            grid=(B // tb,),
            in_specs=[
                pl.BlockSpec((tb * Sp, Np), lambda i: (i, 0)),  # x batch tile
                pl.BlockSpec((Np, Np), lambda i: (0, 0)),       # w1^T (replicated)
                pl.BlockSpec((1, Np), lambda i: (0, 0)),        # b1   (replicated)
                pl.BlockSpec((Sp, Sp), lambda i: (0, 0)),       # w2   (replicated)
            ],
            out_specs=pl.BlockSpec((tb * Sp, Np), lambda i: (i, 0)),
        ),
        compiler_params=pltpu.CompilerParams(
            dimension_semantics=("parallel",),
        ),
        cost_estimate=cost,
    )(xp, w1t, b1p, w2p)

    # Drop the padding; pure layout plumbing on a tiny slab.
    return out.reshape(B, Sp, Np)[:, :S, :N]


def gcn_reference(x, w1, b1, w2):
    # Pure-JAX reference mirroring the PyTorch module exactly.
    h = jnp.einsum("bsn,mn->bsm", x, w1) + b1[None, None, :]
    h = h - x
    out = jnp.einsum("ts,bsn->btn", w2, h)
    return jnp.maximum(out, 0.0)


if __name__ == "__main__":
    B = 2
    num_state = 32   # S
    num_node = 16    # N

    key = jax.random.PRNGKey(0)
    kx, k1, kb, k2 = jax.random.split(key, 4)

    x = jax.random.normal(kx, (B, num_state, num_node), dtype=jnp.float32)
    # Deterministic synthetic parameters (nn.Conv1d kernel_size=1 weights squeezed).
    w1 = jax.random.normal(k1, (num_node, num_node), dtype=jnp.float32) * 0.1    # conv1.weight[:, :, 0]
    b1 = jax.random.normal(kb, (num_node,), dtype=jnp.float32) * 0.1             # conv1.bias
    w2 = jax.random.normal(k2, (num_state, num_state), dtype=jnp.float32) * 0.1  # conv2.weight[:, :, 0]

    out = gcn_forward(x, w1, b1, w2)
    out = jax.block_until_ready(out)

    ref = gcn_reference(x, w1, b1, w2)
    assert out.shape == (B, num_state, num_node)
    assert jnp.allclose(out, ref, atol=1e-5, rtol=1e-5), "mismatch vs reference"

    print("KERNEL_OK")
</pallas_src>

<mosaic_0001>
module attributes {stable_mosaic.version = 11 : i64} {
  func.func @gcn_kernel(%arg0: i32, %arg1: memref<64x128xf32, #tpu.memory_space<vmem>>, %arg2: memref<128x128xf32, #tpu.memory_space<vmem>>, %arg3: memref<1x128xf32, #tpu.memory_space<vmem>>, %arg4: memref<32x32xf32, #tpu.memory_space<vmem>>, %arg5: memref<64x128xf32, #tpu.memory_space<vmem>>) attributes {dimension_semantics = [#tpu.dimension_semantics<parallel>], iteration_bounds = array<i64: 1>, scalar_prefetch = 0 : i64, scratch_operands = 0 : i64, tpu.core_type = #tpu.core_type<tc>, window_params = [{transform_indices = @transform_0, window_bounds = array<i64: 64, 128>}, {pipeline_mode = #tpu.pipeline_mode<synchronous>, transform_indices = @transform_1, window_bounds = array<i64: 128, 128>}, {pipeline_mode = #tpu.pipeline_mode<synchronous>, transform_indices = @transform_2, window_bounds = array<i64: 1, 128>}, {pipeline_mode = #tpu.pipeline_mode<synchronous>, transform_indices = @transform_3, window_bounds = array<i64: 32, 32>}, {transform_indices = @transform_4, window_bounds = array<i64: 64, 128>}]} {
    %c0 = arith.constant 0 : index
    %c0_0 = arith.constant 0 : index
    %0 = vector.load %arg1[%c0, %c0_0] : memref<64x128xf32, #tpu.memory_space<vmem>>, vector<64x128xf32>
    %c0_1 = arith.constant 0 : index
    %c0_2 = arith.constant 0 : index
    %1 = vector.load %arg2[%c0_1, %c0_2] : memref<128x128xf32, #tpu.memory_space<vmem>>, vector<128x128xf32>
    %c0_3 = arith.constant 0 : index
    %c0_4 = arith.constant 0 : index
    %2 = vector.load %arg3[%c0_3, %c0_4] : memref<1x128xf32, #tpu.memory_space<vmem>>, vector<1x128xf32>
    %c0_5 = arith.constant 0 : index
    %c0_6 = arith.constant 0 : index
    %3 = vector.load %arg4[%c0_5, %c0_6] : memref<32x32xf32, #tpu.memory_space<vmem>>, vector<32x32xf32>
    %cst = arith.constant dense<0.000000e+00> : vector<64x128xf32>
    %4 = tpu.matmul %0, %1, %cst {dimension_numbers = #tpu.dot_dimension_numbers<[1], [0], [0], [1], [0, 0, 1, 1], [], []>} : vector<64x128xf32>, vector<128x128xf32>, vector<64x128xf32> -> vector<64x128xf32>
    %5 = vector.broadcast %2 : vector<1x128xf32> to vector<64x128xf32>
    %6 = arith.addf %4, %5 : vector<64x128xf32>
    %7 = arith.subf %6, %0 : vector<64x128xf32>
    %8 = vector.extract_strided_slice %7 {offsets = [0, 0], sizes = [32, 128], strides = [1, 1]} : vector<64x128xf32> to vector<32x128xf32>
    %cst_7 = arith.constant dense<0.000000e+00> : vector<32x128xf32>
    %9 = tpu.matmul %3, %8, %cst_7 {dimension_numbers = #tpu.dot_dimension_numbers<[1], [0], [0], [1], [0, 0, 1, 1], [], []>} : vector<32x32xf32>, vector<32x128xf32>, vector<32x128xf32> -> vector<32x128xf32>
    %cst_8 = arith.constant 0.000000e+00 : f32
    %10 = vector.broadcast %cst_8 : f32 to vector<32x128xf32>
    %11 = arith.maximumf %9, %10 : vector<32x128xf32>
    %c0_9 = arith.constant 0 : index
    %c0_10 = arith.constant 0 : index
    %12 = vector.load %arg5[%c0_9, %c0_10] : memref<64x128xf32, #tpu.memory_space<vmem>>, vector<32x128xf32>
    tpu.vector_store %arg5[%c0_9, %c0_10], %11 {strides = array<i32>} : memref<64x128xf32, #tpu.memory_space<vmem>>, vector<32x128xf32>,
    %13 = vector.extract_strided_slice %7 {offsets = [32, 0], sizes = [32, 128], strides = [1, 1]} : vector<64x128xf32> to vector<32x128xf32>
    %cst_11 = arith.constant dense<0.000000e+00> : vector<32x128xf32>
    %14 = tpu.matmul %3, %13, %cst_11 {dimension_numbers = #tpu.dot_dimension_numbers<[1], [0], [0], [1], [0, 0, 1, 1], [], []>} : vector<32x32xf32>, vector<32x128xf32>, vector<32x128xf32> -> vector<32x128xf32>
    %cst_12 = arith.constant 0.000000e+00 : f32
    %15 = vector.broadcast %cst_12 : f32 to vector<32x128xf32>
    %16 = arith.maximumf %14, %15 : vector<32x128xf32>
    %c32 = arith.constant 32 : index
    %c0_13 = arith.constant 0 : index
    %17 = vector.load %arg5[%c32, %c0_13] : memref<64x128xf32, #tpu.memory_space<vmem>>, vector<32x128xf32>
    tpu.vector_store %arg5[%c32, %c0_13], %16 {strides = array<i32>} : memref<64x128xf32, #tpu.memory_space<vmem>>, vector<32x128xf32>,
    return
  }
  func.func @transform_0(%arg0: i32) -> (i32, i32) {
    %c0_i32 = arith.constant 0 : i32
    %c0_i32_0 = arith.constant 0 : i32
    return %arg0, %c0_i32 : i32, i32
  }
  func.func @transform_1(%arg0: i32) -> (i32, i32) {
    %c0_i32 = arith.constant 0 : i32
    %c0_i32_0 = arith.constant 0 : i32
    %c0_i32_1 = arith.constant 0 : i32
    return %c0_i32, %c0_i32_0 : i32, i32
  }
  func.func @transform_2(%arg0: i32) -> (i32, i32) {
    %c0_i32 = arith.constant 0 : i32
    %c0_i32_0 = arith.constant 0 : i32
    %c0_i32_1 = arith.constant 0 : i32
    return %c0_i32, %c0_i32_0 : i32, i32
  }
  func.func @transform_3(%arg0: i32) -> (i32, i32) {
    %c0_i32 = arith.constant 0 : i32
    %c0_i32_0 = arith.constant 0 : i32
    %c0_i32_1 = arith.constant 0 : i32
    return %c0_i32, %c0_i32_0 : i32, i32
  }
  func.func @transform_4(%arg0: i32) -> (i32, i32) {
    %c0_i32 = arith.constant 0 : i32
    %c0_i32_0 = arith.constant 0 : i32
    return %arg0, %c0_i32 : i32, i32
  }
}

</mosaic_0001>

<llo_original>
// kernel: tpu_custom_call.1
$region0: #{tpu_custom_call.1}
  #allocation0 [shape = 'u32[]', space=smem, size = 0x4, offset = 0x4, fixed_abs, tag = 'smem constant byte address 0x4 - core index']
  #allocation1 [shape = 'u32[72,128]{1,0:T(1,128)}', space=vmem, size = 0x9000, scoped, tag = 'internal scratch']
  %s0 = inlined_call_operand.hbm [shape: f32[64,128], index: 0, kind: input, shape index: {}]
  %s1 = inlined_call_operand.hbm [shape: f32[128,128], index: 1, kind: input, shape index: {}]
  %s2 = inlined_call_operand.vmem [shape: f32[1,128], index: 2, kind: input, shape index: {}]
  %s3 = inlined_call_operand.hbm [shape: f32[32,32], index: 3, kind: input, shape index: {}]
  %s4 = inlined_call_operand.hbm [shape: f32[64,128], index: 4, kind: output, shape index: {}]
  %s5 = sld [smem:[#allocation0]]
  $region38: #{tpu_custom_call.1} parent=0
    _
  %s7 = ssub.s32 1, %s5
  %s8 = scalar_select 0, %s7, %s5
  $region1: #{tpu_custom_call.1} parent=0
    #allocation2 [shape = 'u8[32768]{0}', space=vmem, size = 0x8000, scoped, tag = 'input window, operand 0, single buffered']
    #allocation3 [shape = 's32[1]{0}', space=sflag, size = 0x4, scoped, tag = 'scoped memory for tpu_custom_call.1']
    #allocation4 [shape = 's32[1]{0}', space=sflag, size = 0x4, scoped, tag = 'scoped memory for tpu_custom_call.1']
    #allocation5 [shape = 'u8[65536]{0}', space=vmem, size = 0x10000, scoped, tag = 'input window, operand 1, single buffered']
    #allocation6 [shape = 's32[1]{0}', space=sflag, size = 0x4, scoped, tag = 'scoped memory for tpu_custom_call.1']
    #allocation7 [shape = 'u8[16384]{0}', space=vmem, size = 0x4000, scoped, tag = 'input window, operand 3, single buffered']
    #allocation8 [shape = 'u8[32768]{0}', space=vmem, size = 0x8000, scoped, tag = 'output window, operand 0, single buffered']
    %9 = vsyncpa [#allocation3], 0
    %10 = vsyncpa [#allocation6], 0
    %11 = vsyncpa [#allocation4], 0
    // Predicated region
    $region2: #{tpu_custom_call.1} parent=1 // pred_check
      _
    $region3: #{tpu_custom_call.1} parent=1 // pred_check_branch
      %13 = sbr.rel (0) target = $region5
    $region4: #{tpu_custom_call.1} parent=1 // pred_region
      %15 = vsyncadd [#allocation3], 0
      %s16 = sshll.u32 %s0, 4
      %s17 = int_to_ptr.hbm [resolvable:$true] %s16
      %s18 = sshll.u32 [#allocation2], 4
      %s19 = int_to_ptr.vmem [resolvable:$true] %s18
      %24 = dma.hbm_to_vmem [thread:$0]  %s17, 1024, %s19, [#allocation3], 128, 128, 8
    $region5: #{tpu_custom_call.1} parent=1 // pred_fallthru
      _
    // Predicated region
    $region6: #{tpu_custom_call.1} parent=1 // pred_check
      _
    $region7: #{tpu_custom_call.1} parent=1 // pred_check_branch
      %26 = sbr.rel (0) target = $region9
    $region8: #{tpu_custom_call.1} parent=1 // pred_region
      %28 = vsyncadd [#allocation6], 0
      %s29 = sshll.u32 %s1, 4
      %s30 = int_to_ptr.hbm [resolvable:$true] %s29
      %s31 = sshll.u32 [#allocation5], 4
      %s32 = int_to_ptr.vmem [resolvable:$true] %s31
      %37 = dma.hbm_to_vmem [thread:$0]  %s30, 2048, %s32, [#allocation6], 128, 128, 8
    $region9: #{tpu_custom_call.1} parent=1 // pred_fallthru
      _
    // Predicated region
    $region10: #{tpu_custom_call.1} parent=1 // pred_check
      _
    $region11: #{tpu_custom_call.1} parent=1 // pred_check_branch
      %39 = sbr.rel (0) target = $region13
    $region12: #{tpu_custom_call.1} parent=1 // pred_region
      _
    $region13: #{tpu_custom_call.1} parent=1 // pred_fallthru
      _
    // Predicated region
    $region14: #{tpu_custom_call.1} parent=1 // pred_check
      _
    $region15: #{tpu_custom_call.1} parent=1 // pred_check_branch
      %41 = sbr.rel (0) target = $region17
    $region16: #{tpu_custom_call.1} parent=1 // pred_region
      %43 = vsyncadd [#allocation6], 0
      %s44 = sshll.u32 %s3, 4
      %s45 = int_to_ptr.hbm [resolvable:$true] %s44
      %s46 = sshll.u32 [#allocation7], 4
      %s47 = int_to_ptr.vmem [resolvable:$true] %s46
      %52 = dma.hbm_to_vmem [thread:$0]  %s45, 512, %s47, [#allocation6], 128, 128, 8
    $region17: #{tpu_custom_call.1} parent=1 // pred_fallthru
      _
    // Predicated region
    $region18: #{tpu_custom_call.1} parent=1 // pred_check
      _
    $region19: #{tpu_custom_call.1} parent=1 // pred_check_branch
      %54 = sbr.rel (0) target = $region21
    $region20: #{tpu_custom_call.1} parent=1 // pred_region
      %56 = dma.done [#allocation3], 1024
    $region21: #{tpu_custom_call.1} parent=1 // pred_fallthru
      _
    // Predicated region
    $region22: #{tpu_custom_call.1} parent=1 // pred_check
      _
    $region23: #{tpu_custom_call.1} parent=1 // pred_check_branch
      %58 = sbr.rel (0) target = $region25
    $region24: #{tpu_custom_call.1} parent=1 // pred_region
      %60 = dma.done [#allocation6], 2048
    $region25: #{tpu_custom_call.1} parent=1 // pred_fallthru
      _
    // Predicated region
    $region26: #{tpu_custom_call.1} parent=1 // pred_check
      _
    $region27: #{tpu_custom_call.1} parent=1 // pred_check_branch
      %62 = sbr.rel (0) target = $region29
    $region28: #{tpu_custom_call.1} parent=1 // pred_region
      %64 = dma.done [#allocation6], 512
    $region29: #{tpu_custom_call.1} parent=1 // pred_fallthru
      _
    %v65 = vld [vmem:[#allocation2] sm:$0xff]
    %v66 = vld [vmem:[#allocation2 + $0x8] sm:$0xff]
    %v67 = vld [vmem:[#allocation2 + $0x10] sm:$0xff]
    %v68 = vld [vmem:[#allocation2 + $0x18] sm:$0xff]
    %v69 = vld [vmem:[#allocation2 + $0x20] sm:$0xff]
    %v70 = vld [vmem:[#allocation2 + $0x28] sm:$0xff]
    %v71 = vld [vmem:[#allocation2 + $0x30] sm:$0xff]
    %v72 = vld [vmem:[#allocation2 + $0x38] sm:$0xff]
    %v73 = vld [vmem:[#allocation5] sm:$0xff]
    %v74 = vld [vmem:[#allocation5 + $0x8] sm:$0xff]
    %v75 = vld [vmem:[#allocation5 + $0x10] sm:$0xff]
    %v76 = vld [vmem:[#allocation5 + $0x18] sm:$0xff]
    %v77 = vld [vmem:[#allocation5 + $0x20] sm:$0xff]
    %v78 = vld [vmem:[#allocation5 + $0x28] sm:$0xff]
    %v79 = vld [vmem:[#allocation5 + $0x30] sm:$0xff]
    %v80 = vld [vmem:[#allocation5 + $0x38] sm:$0xff]
    %v81 = vld [vmem:[#allocation5 + $0x40] sm:$0xff]
    %v82 = vld [vmem:[#allocation5 + $0x48] sm:$0xff]
    %v83 = vld [vmem:[#allocation5 + $0x50] sm:$0xff]
    %v84 = vld [vmem:[#allocation5 + $0x58] sm:$0xff]
    %v85 = vld [vmem:[#allocation5 + $0x60] sm:$0xff]
    %v86 = vld [vmem:[#allocation5 + $0x68] sm:$0xff]
    %v87 = vld [vmem:[#allocation5 + $0x70] sm:$0xff]
    %v88 = vld [vmem:[#allocation5 + $0x78] sm:$0xff]
    %v89 = vld [vmem:[%s2] sm:$0x1]
    %v90 = vld [vmem:[#allocation7] sm:$0xff]
    %v91 = vld [vmem:[#allocation7 + $0x8] sm:$0xff]
    %v92 = vld [vmem:[#allocation7 + $0x10] sm:$0xff]
    %v93 = vld [vmem:[#allocation7 + $0x18] sm:$0xff]
    %v95 = vperm.slane %v89, 0
    %97 = vmatpush.msra.mxu0 %v88
    %98 = vmatpush.msra.mxu0 %v87
    %99 = vmatpush.msra.mxu0 %v86
    %100 = vmatpush.msra.mxu0 %v85
    %101 = vmatpush.msra.mxu0 %v84
    %102 = vmatpush.msra.mxu0 %v83
    %103 = vmatpush.msra.mxu0 %v82
    %104 = vmatpush.msra.mxu0 %v81
    %105 = vmatpush.msra.mxu0 %v80
    %106 = vmatpush.msra.mxu0 %v79
    %107 = vmatpush.msra.mxu0 %v78
    %108 = vmatpush.msra.mxu0 %v77
    %109 = vmatpush.msra.mxu0 %v76
    %110 = vmatpush.msra.mxu0 %v75
    %111 = vmatpush.msra.mxu0 %v74
    %112 = vmatpush.msra.mxu0 %v73
    %113 = vmatmul.f32.gmra.mxu0 %v65
    %v114 = vpop.f32.mrf.mxu0
    %v115 = vadd.f32 %v95, %v114
    %116 = vmatmul.f32.gmra.mxu0 %v66
    %v117 = vpop.f32.mrf.mxu0
    %v118 = vadd.f32 %v95, %v117
    %119 = vmatmul.f32.gmra.mxu0 %v67
    %v120 = vpop.f32.mrf.mxu0
    %v121 = vadd.f32 %v95, %v120
    %122 = vmatmul.f32.gmra.mxu0 %v68
    %v123 = vpop.f32.mrf.mxu0
    %v124 = vadd.f32 %v95, %v123
    %125 = vmatmul.f32.gmra.mxu0 %v69
    %v126 = vpop.f32.mrf.mxu0
    %v127 = vadd.f32 %v95, %v126
    %128 = vmatmul.f32.gmra.mxu0 %v70
    %v129 = vpop.f32.mrf.mxu0
    %v130 = vadd.f32 %v95, %v129
    %131 = vmatmul.f32.gmra.mxu0 %v71
    %v132 = vpop.f32.mrf.mxu0
    %v133 = vadd.f32 %v95, %v132
    %134 = vmatmul.f32.gmra.mxu0 %v72
    %v135 = vpop.f32.mrf.mxu0
    %v136 = vadd.f32 %v95, %v135
    %137 = vdwg.mxu0
    %v138 = vsub.f32 %v115, %v65
    %v139 = vsub.f32 %v118, %v66
    %v140 = vsub.f32 %v121, %v67
    %v141 = vsub.f32 %v124, %v68
    %v142 = vsub.f32 %v127, %v69
    %v143 = vsub.f32 %v130, %v70
    %v144 = vsub.f32 %v133, %v71
    %v145 = vsub.f32 %v136, %v72
    %vm146 = vcmask 261120
    %v148 = vsel %vm146, %v90, 0
    %v151 = vsel %vm146, %v91, 0
    %v154 = vsel %vm146, %v92, 0
    %v157 = vsel %vm146, %v93, 0
    %159 = vmatpush.msra.mxu0 0.0
    %160 = vmatpush.msra.mxu0 0.0
    %161 = vmatpush.msra.mxu0 0.0
    %162 = vmatpush.msra.mxu0 0.0
    %163 = vmatpush.msra.mxu0 0.0
    %164 = vmatpush.msra.mxu0 0.0
    %165 = vmatpush.msra.mxu0 0.0
    %166 = vmatpush.msra.mxu0 0.0
    %167 = vmatpush.msra.mxu0 0.0
    %168 = vmatpush.msra.mxu0 0.0
    %169 = vmatpush.msra.mxu0 0.0
    %170 = vmatpush.msra.mxu0 0.0
    %171 = vmatpush.msra.mxu0 %v141
    %172 = vmatpush.msra.mxu0 %v140
    %173 = vmatpush.msra.mxu0 %v139
    %174 = vmatpush.msra.mxu0 %v138
    %175 = vmatmul.f32.gmra.mxu0 %v148
    %v176 = vpop.f32.mrf.mxu0
    %v177 = vadd.f32 0.0, %v176
    %178 = vmatmul.f32.gmra.mxu0 %v151
    %v179 = vpop.f32.mrf.mxu0
    %v180 = vadd.f32 0.0, %v179
    %181 = vmatmul.f32.gmra.mxu0 %v154
    %v182 = vpop.f32.mrf.mxu0
    %v183 = vadd.f32 0.0, %v182
    %184 = vmatmul.f32.gmra.mxu0 %v157
    %v185 = vpop.f32.mrf.mxu0
    %v186 = vadd.f32 0.0, %v185
    %187 = vdwg.mxu0
    %v188 = vmax.f32 %v177, 0.0
    %v189 = vmax.f32 %v180, 0.0
    %v190 = vmax.f32 %v183, 0.0
    %v191 = vmax.f32 %v186, 0.0
    %192 = vst [vmem:[#allocation8] sm:$0xff] %v188
    %193 = vst [vmem:[#allocation8 + $0x8] sm:$0xff] %v189
    %194 = vst [vmem:[#allocation8 + $0x10] sm:$0xff] %v190
    %195 = vst [vmem:[#allocation8 + $0x18] sm:$0xff] %v191
    %196 = vmatpush.msra.mxu0 0.0
    %197 = vmatpush.msra.mxu0 0.0
    %198 = vmatpush.msra.mxu0 0.0
    %199 = vmatpush.msra.mxu0 0.0
    %200 = vmatpush.msra.mxu0 0.0
    %201 = vmatpush.msra.mxu0 0.0
    %202 = vmatpush.msra.mxu0 0.0
    %203 = vmatpush.msra.mxu0 0.0
    %204 = vmatpush.msra.mxu0 0.0
    %205 = vmatpush.msra.mxu0 0.0
    %206 = vmatpush.msra.mxu0 0.0
    %207 = vmatpush.msra.mxu0 0.0
    %208 = vmatpush.msra.mxu0 %v145
    %209 = vmatpush.msra.mxu0 %v144
    %210 = vmatpush.msra.mxu0 %v143
    %211 = vmatpush.msra.mxu0 %v142
    %212 = vmatmul.f32.gmra.mxu0 %v148
    %v213 = vpop.f32.mrf.mxu0
    %v214 = vadd.f32 0.0, %v213
    %215 = vmatmul.f32.gmra.mxu0 %v151
    %v216 = vpop.f32.mrf.mxu0
    %v217 = vadd.f32 0.0, %v216
    %218 = vmatmul.f32.gmra.mxu0 %v154
    %v219 = vpop.f32.mrf.mxu0
    %v220 = vadd.f32 0.0, %v219
    %221 = vmatmul.f32.gmra.mxu0 %v157
    %v222 = vpop.f32.mrf.mxu0
    %v223 = vadd.f32 0.0, %v222
    %224 = vdwg.mxu0
    %v225 = vmax.f32 %v214, 0.0
    %v226 = vmax.f32 %v217, 0.0
    %v227 = vmax.f32 %v220, 0.0
    %v228 = vmax.f32 %v223, 0.0
    %229 = vst [vmem:[#allocation8 + $0x20] sm:$0xff] %v225
    %230 = vst [vmem:[#allocation8 + $0x28] sm:$0xff] %v226
    %231 = vst [vmem:[#allocation8 + $0x30] sm:$0xff] %v227
    %232 = vst [vmem:[#allocation8 + $0x38] sm:$0xff] %v228
    // Predicated region
    $region30: #{tpu_custom_call.1} parent=1 // pred_check
      _
    $region31: #{tpu_custom_call.1} parent=1 // pred_check_branch
      %234 = sbr.rel (0) target = $region33
    $region32: #{tpu_custom_call.1} parent=1 // pred_region
      %236 = vsyncadd [#allocation4], 0
      %s237 = sshll.u32 [#allocation8], 4
      %s238 = int_to_ptr.vmem [resolvable:$true] %s237
      %s239 = sshll.u32 %s4, 4
      %s240 = int_to_ptr.hbm [resolvable:$true] %s239
      %245 = dma.vmem_to_hbm [thread:$0]  %s238, 1024, %s240, [#allocation4], 128, 128, 8
    $region33: #{tpu_custom_call.1} parent=1 // pred_fallthru
      _
    // Predicated region
    $region34: #{tpu_custom_call.1} parent=1 // pred_check
      _
    $region35: #{tpu_custom_call.1} parent=1 // pred_check_branch
      %247 = sbr.rel (0) target = $region37
    $region36: #{tpu_custom_call.1} parent=1 // pred_region
      %249 = dma.done [#allocation4], 1024
    $region37: #{tpu_custom_call.1} parent=1 // pred_fallthru
      _
    %250 = vsyncpa [#allocation3], 1
    %251 = vsyncpa [#allocation6], 1
    %252 = vsyncpa [#allocation4], 1

</llo_original>
